<compile_context>
chip_gen: v5e
topology: v5e:2x2
jax: 0.10.0
libtpu: 0.0.40
codegen_flags: <defaults>
</compile_context>

<pallas_src>
import functools

import jax
import jax.numpy as jnp
from jax.experimental import pallas as pl
from jax.experimental.pallas import tpu as pltpu


def _round_up(v, m):
    return ((v + m - 1) // m) * m


def _choose_tile_n(n):
    """Pick the N tile size.

    - n < 32: one block equal to the full array extent (no divisibility
      constraint, no wasted rows).
    - n >= 32: split into ~2 tiles (multiple of 16) so the grid has at least
      two "parallel" steps for v7x's two TensorCores; cap at 1024 rows so
      single-TC v5e/v6e see at most a couple of cheap grid steps.
    """
    if n < 32:
        return n
    half = _round_up(pl.cdiv(n, 2), 16)
    return min(half, 1024)


def _fused_predictor_kernel(x_ref, w_ref, b_ref, out_ref):
    """One fused (cls + bbox) linear layer.

    x_ref:   (TILE_N, C)      f32 ROI features (cast to bf16 in-vreg)
    w_ref:   (C, K_pad)       bf16 concatenated, lane-padded weights (resident)
    b_ref:   (1, K_pad)       f32 concatenated, lane-padded bias (resident)
    out_ref: (TILE_N, K_pad)  f32 fused output slab
    """
    x_bf = x_ref[...].astype(jnp.bfloat16)
    acc = jnp.dot(x_bf, w_ref[...], preferred_element_type=jnp.float32)
    out_ref[...] = acc + b_ref[...]


def _pallas_fused_forward(x2, w_cat_bf, b_cat_f32):
    """x2: (N, C) f32;  w_cat_bf: (C, K_pad) bf16;  b_cat_f32: (1, K_pad) f32."""
    n, c = x2.shape
    k_pad = w_cat_bf.shape[1]

    tile_n = _choose_tile_n(n)
    grid = (pl.cdiv(n, tile_n),)

    return pl.pallas_call(
        _fused_predictor_kernel,
        out_shape=jax.ShapeDtypeStruct((n, k_pad), jnp.float32),
        grid=grid,
        in_specs=[
            pl.BlockSpec((tile_n, c), lambda i: (i, 0)),   # x: tiled on N, full C
            pl.BlockSpec((c, k_pad), lambda i: (0, 0)),    # W: resident
            pl.BlockSpec((1, k_pad), lambda i: (0, 0)),    # b: resident
        ],
        out_specs=pl.BlockSpec((tile_n, k_pad), lambda i: (i, 0)),
        compiler_params=pltpu.CompilerParams(
            # Independent across ROI tiles -> shard across v7x's 2 TCs;
            # harmless serial loop on single-TC v5e/v6e.
            dimension_semantics=("parallel",),
        ),
    )(x2, w_cat_bf, b_cat_f32)


@functools.partial(jax.jit, static_argnames=("num_classes", "num_bbox"))
def fastrcnn_predictor(x, w_cat_bf, b_cat_f32, *, num_classes, num_bbox):
    """JAX/Pallas equivalent of FastRCNNPredictor.forward.

    x: (N, C) or (N, C, 1, 1) float32 ROI features.
    Returns (scores[N, num_classes], bbox_deltas[N, 4*num_classes]) in float32.
    """
    if x.ndim == 4:
        assert x.shape[2:] == (1, 1), (
            f"x has the wrong shape, expecting the last two dimensions to be "
            f"[1,1] instead of {list(x.shape[2:])}")
    x2 = x.reshape(x.shape[0], -1)  # flatten(start_dim=1)

    out = _pallas_fused_forward(x2, w_cat_bf, b_cat_f32)

    scores = out[:, :num_classes]
    bbox_deltas = out[:, num_classes:num_classes + num_bbox]
    return scores, bbox_deltas


class DetectorNetworkHead:
    """Box-predictor head of DetectorNetwork (the part replaced in __init__).

    All per-call weight prep (transpose, concat, lane pad, bf16 cast) is done
    once here, so the forward path is: one pallas_call + two cheap slices.
    """

    def __init__(self, config, in_features, key):
        num_classes = len(config["class_labels"]) + 1  # + background
        num_bbox = num_classes * 4
        k1, k2, k3, k4 = jax.random.split(key, 4)

        # Deterministic synthetic init (matches nn.Linear parameter shapes).
        bound = 1.0 / jnp.sqrt(in_features)
        self.w_cls = jax.random.uniform(
            k1, (num_classes, in_features), jnp.float32, -bound, bound)
        self.b_cls = jax.random.uniform(
            k2, (num_classes,), jnp.float32, -bound, bound)
        self.w_bbox = jax.random.uniform(
            k3, (num_bbox, in_features), jnp.float32, -bound, bound)
        self.b_bbox = jax.random.uniform(
            k4, (num_bbox,), jnp.float32, -bound, bound)

        self.num_classes = num_classes
        self.num_bbox = num_bbox

        # ---- one-time fused / lane-padded parameter prep (hoisted) ----------
        k = num_classes + num_bbox
        k_pad = _round_up(k, 128)              # lane-dense output slab
        w_cat = jnp.concatenate(
            [jnp.transpose(self.w_cls), jnp.transpose(self.w_bbox)], axis=1)
        w_cat = jnp.pad(w_cat, ((0, 0), (0, k_pad - k)))
        self.w_cat_bf = jax.device_put(w_cat.astype(jnp.bfloat16))

        b_cat = jnp.concatenate([self.b_cls, self.b_bbox]).reshape(1, k)
        self.b_cat_f32 = jax.device_put(
            jnp.pad(b_cat, ((0, 0), (0, k_pad - k))).astype(jnp.float32))

    def __call__(self, roi_features):
        # TODO(synk): if the detector runs several images per step, concatenate
        # all images' ROIs along N before calling to amortize per-call overhead.
        return fastrcnn_predictor(
            roi_features, self.w_cat_bf, self.b_cat_f32,
            num_classes=self.num_classes, num_bbox=self.num_bbox)


if __name__ == "__main__":
    key = jax.random.PRNGKey(0)
    k_feat, k_head = jax.random.split(key)

    config = {"pretrained": False,
              "class_labels": ["car", "person", "bike", "dog"]}
    in_features = 256   # small stand-in for the box head's representation size
    num_rois = 8        # number of ROI feature vectors
    num_classes = len(config["class_labels"]) + 1

    # ROI-pooled features as produced by the box head: (N, C, 1, 1).
    roi_features = jax.random.normal(
        k_feat, (num_rois, in_features, 1, 1), jnp.float32)

    head = DetectorNetworkHead(config, in_features, k_head)
    scores, bbox_deltas = head(roi_features)
    jax.block_until_ready((scores, bbox_deltas))

    # Reference 1: same bf16 input/weight cast, f32 accumulation (tight check).
    x_flat = roi_features.reshape(num_rois, -1)
    x_bf = x_flat.astype(jnp.bfloat16)
    ref_scores = jnp.dot(x_bf, head.w_cls.T.astype(jnp.bfloat16),
                         preferred_element_type=jnp.float32) + head.b_cls
    ref_deltas = jnp.dot(x_bf, head.w_bbox.T.astype(jnp.bfloat16),
                         preferred_element_type=jnp.float32) + head.b_bbox

    # Reference 2: full f32 linear (matches the PyTorch module; loose tolerance
    # covers the bf16 MXU path).
    ref_scores_f32 = x_flat @ head.w_cls.T + head.b_cls
    ref_deltas_f32 = x_flat @ head.w_bbox.T + head.b_bbox

    assert scores.shape == (num_rois, num_classes)
    assert bbox_deltas.shape == (num_rois, num_classes * 4)
    assert jnp.allclose(scores, ref_scores, atol=1e-3, rtol=1e-3)
    assert jnp.allclose(bbox_deltas, ref_deltas, atol=1e-3, rtol=1e-3)
    assert jnp.allclose(scores, ref_scores_f32, atol=5e-2, rtol=5e-2)
    assert jnp.allclose(bbox_deltas, ref_deltas_f32, atol=5e-2, rtol=5e-2)

    print("KERNEL_OK")
</pallas_src>

<mosaic_0001>
module attributes {stable_mosaic.version = 11 : i64} {
  func.func @_fused_predictor_kernel(%arg0: i32, %arg1: memref<8x256xf32, #tpu.memory_space<vmem>>, %arg2: memref<256x128xbf16, #tpu.memory_space<vmem>>, %arg3: memref<1x128xf32, #tpu.memory_space<vmem>>, %arg4: memref<8x128xf32, #tpu.memory_space<vmem>>) attributes {dimension_semantics = [#tpu.dimension_semantics<parallel>], iteration_bounds = array<i64: 1>, scalar_prefetch = 0 : i64, scratch_operands = 0 : i64, tpu.core_type = #tpu.core_type<tc>, window_params = [{transform_indices = @transform_0, window_bounds = array<i64: 8, 256>}, {pipeline_mode = #tpu.pipeline_mode<synchronous>, transform_indices = @transform_1, window_bounds = array<i64: 256, 128>}, {pipeline_mode = #tpu.pipeline_mode<synchronous>, transform_indices = @transform_2, window_bounds = array<i64: 1, 128>}, {transform_indices = @transform_3, window_bounds = array<i64: 8, 128>}]} {
    %c0 = arith.constant 0 : index
    %c0_0 = arith.constant 0 : index
    %0 = vector.load %arg1[%c0, %c0_0] : memref<8x256xf32, #tpu.memory_space<vmem>>, vector<8x256xf32>
    %1 = arith.truncf %0 : vector<8x256xf32> to vector<8x256xbf16>
    %c0_1 = arith.constant 0 : index
    %c0_2 = arith.constant 0 : index
    %2 = vector.load %arg2[%c0_1, %c0_2] : memref<256x128xbf16, #tpu.memory_space<vmem>>, vector<256x128xbf16>
    %cst = arith.constant dense<0.000000e+00> : vector<8x128xf32>
    %3 = tpu.matmul %1, %2, %cst {dimension_numbers = #tpu.dot_dimension_numbers<[1], [0], [0], [1], [0, 0, 1, 1], [], []>} : vector<8x256xbf16>, vector<256x128xbf16>, vector<8x128xf32> -> vector<8x128xf32>
    %c0_3 = arith.constant 0 : index
    %c0_4 = arith.constant 0 : index
    %4 = vector.load %arg3[%c0_3, %c0_4] : memref<1x128xf32, #tpu.memory_space<vmem>>, vector<1x128xf32>
    %5 = vector.broadcast %4 : vector<1x128xf32> to vector<8x128xf32>
    %6 = arith.addf %3, %5 : vector<8x128xf32>
    %c0_5 = arith.constant 0 : index
    %c0_6 = arith.constant 0 : index
    %7 = vector.load %arg4[%c0_5, %c0_6] : memref<8x128xf32, #tpu.memory_space<vmem>>, vector<8x128xf32>
    tpu.vector_store %arg4[%c0_5, %c0_6], %6 {strides = array<i32>} : memref<8x128xf32, #tpu.memory_space<vmem>>, vector<8x128xf32>,
    return
  }
  func.func @transform_0(%arg0: i32) -> (i32, i32) {
    %c0_i32 = arith.constant 0 : i32
    %c0_i32_0 = arith.constant 0 : i32
    return %arg0, %c0_i32 : i32, i32
  }
  func.func @transform_1(%arg0: i32) -> (i32, i32) {
    %c0_i32 = arith.constant 0 : i32
    %c0_i32_0 = arith.constant 0 : i32
    %c0_i32_1 = arith.constant 0 : i32
    return %c0_i32, %c0_i32_0 : i32, i32
  }
  func.func @transform_2(%arg0: i32) -> (i32, i32) {
    %c0_i32 = arith.constant 0 : i32
    %c0_i32_0 = arith.constant 0 : i32
    %c0_i32_1 = arith.constant 0 : i32
    return %c0_i32, %c0_i32_0 : i32, i32
  }
  func.func @transform_3(%arg0: i32) -> (i32, i32) {
    %c0_i32 = arith.constant 0 : i32
    %c0_i32_0 = arith.constant 0 : i32
    return %arg0, %c0_i32 : i32, i32
  }
}

</mosaic_0001>

<llo_original>
// kernel: fastrcnn_predictor.1
$region0: #{fastrcnn_predictor.1}
  #allocation0 [shape = 'u32[]', space=smem, size = 0x4, offset = 0x4, fixed_abs, tag = 'smem constant byte address 0x4 - core index']
  #allocation1 [shape = 'u32[72,128]{1,0:T(1,128)}', space=vmem, size = 0x9000, scoped, tag = 'internal scratch']
  %s0 = inlined_call_operand.vmem [shape: f32[8,256], index: 0, kind: input, shape index: {}]
  %s1 = inlined_call_operand.hbm [shape: bf16[256,128], index: 1, kind: input, shape index: {}]
  %s2 = inlined_call_operand.vmem [shape: f32[1,128], index: 2, kind: input, shape index: {}]
  %s3 = inlined_call_operand.vmem [shape: f32[8,128], index: 3, kind: output, shape index: {}]
  %s4 = sld [smem:[#allocation0]]
  $region26: #{fastrcnn_predictor.1} parent=0
    _
  %s6 = ssub.s32 1, %s4
  %s7 = scalar_select 0, %s6, %s4
  $region1: #{fastrcnn_predictor.1} parent=0
    #allocation2 [shape = 'u8[65536]{0}', space=vmem, size = 0x10000, scoped, tag = 'input window, operand 1, single buffered']
    #allocation3 [shape = 's32[1]{0}', space=sflag, size = 0x4, scoped, tag = 'scoped memory for fastrcnn_predictor.1']
    %8 = vsyncpa [#allocation3], 0
    // Predicated region
    $region2: #{fastrcnn_predictor.1} parent=1 // pred_check
      _
    $region3: #{fastrcnn_predictor.1} parent=1 // pred_check_branch
      %10 = sbr.rel (0) target = $region5
    $region4: #{fastrcnn_predictor.1} parent=1 // pred_region
      _
    $region5: #{fastrcnn_predictor.1} parent=1 // pred_fallthru
      _
    // Predicated region
    $region6: #{fastrcnn_predictor.1} parent=1 // pred_check
      _
    $region7: #{fastrcnn_predictor.1} parent=1 // pred_check_branch
      %12 = sbr.rel (0) target = $region9
    $region8: #{fastrcnn_predictor.1} parent=1 // pred_region
      %14 = vsyncadd [#allocation3], 0
      %s15 = sshll.u32 %s1, 4
      %s16 = int_to_ptr.hbm [resolvable:$true] %s15
      %s17 = sshll.u32 [#allocation2], 4
      %s18 = int_to_ptr.vmem [resolvable:$true] %s17
      %23 = dma.hbm_to_vmem [thread:$0]  %s16, 2048, %s18, [#allocation3], 64, 64, 4
    $region9: #{fastrcnn_predictor.1} parent=1 // pred_fallthru
      _
    // Predicated region
    $region10: #{fastrcnn_predictor.1} parent=1 // pred_check
      _
    $region11: #{fastrcnn_predictor.1} parent=1 // pred_check_branch
      %25 = sbr.rel (0) target = $region13
    $region12: #{fastrcnn_predictor.1} parent=1 // pred_region
      _
    $region13: #{fastrcnn_predictor.1} parent=1 // pred_fallthru
      _
    // Predicated region
    $region14: #{fastrcnn_predictor.1} parent=1 // pred_check
      _
    $region15: #{fastrcnn_predictor.1} parent=1 // pred_check_branch
      %27 = sbr.rel (0) target = $region17
    $region16: #{fastrcnn_predictor.1} parent=1 // pred_region
      %29 = dma.done [#allocation3], 2048
    $region17: #{fastrcnn_predictor.1} parent=1 // pred_fallthru
      _
    %v30 = vld [vmem:[%s0] sm:$0xff]
    %v31 = vld [vmem:[%s0 + $0x8] sm:$0xff]
    %v32 = vpack.c.bf16 %v30, %v30
    %v33 = vpack.c.bf16 %v31, %v31
    %v34 = vld [vmem:[#allocation2] sm:$0xf]
    %v35 = vld [vmem:[#allocation2 + $0x4] sm:$0xf]
    %v36 = vld [vmem:[#allocation2 + $0x8] sm:$0xf]
    %v37 = vld [vmem:[#allocation2 + $0xc] sm:$0xf]
    %v38 = vld [vmem:[#allocation2 + $0x10] sm:$0xf]
    %v39 = vld [vmem:[#allocation2 + $0x14] sm:$0xf]
    %v40 = vld [vmem:[#allocation2 + $0x18] sm:$0xf]
    %v41 = vld [vmem:[#allocation2 + $0x1c] sm:$0xf]
    %v42 = vld [vmem:[#allocation2 + $0x20] sm:$0xf]
    %v43 = vld [vmem:[#allocation2 + $0x24] sm:$0xf]
    %v44 = vld [vmem:[#allocation2 + $0x28] sm:$0xf]
    %v45 = vld [vmem:[#allocation2 + $0x2c] sm:$0xf]
    %v46 = vld [vmem:[#allocation2 + $0x30] sm:$0xf]
    %v47 = vld [vmem:[#allocation2 + $0x34] sm:$0xf]
    %v48 = vld [vmem:[#allocation2 + $0x38] sm:$0xf]
    %v49 = vld [vmem:[#allocation2 + $0x3c] sm:$0xf]
    %v50 = vld [vmem:[#allocation2 + $0x40] sm:$0xf]
    %v51 = vld [vmem:[#allocation2 + $0x44] sm:$0xf]
    %v52 = vld [vmem:[#allocation2 + $0x48] sm:$0xf]
    %v53 = vld [vmem:[#allocation2 + $0x4c] sm:$0xf]
    %v54 = vld [vmem:[#allocation2 + $0x50] sm:$0xf]
    %v55 = vld [vmem:[#allocation2 + $0x54] sm:$0xf]
    %v56 = vld [vmem:[#allocation2 + $0x58] sm:$0xf]
    %v57 = vld [vmem:[#allocation2 + $0x5c] sm:$0xf]
    %v58 = vld [vmem:[#allocation2 + $0x60] sm:$0xf]
    %v59 = vld [vmem:[#allocation2 + $0x64] sm:$0xf]
    %v60 = vld [vmem:[#allocation2 + $0x68] sm:$0xf]
    %v61 = vld [vmem:[#allocation2 + $0x6c] sm:$0xf]
    %v62 = vld [vmem:[#allocation2 + $0x70] sm:$0xf]
    %v63 = vld [vmem:[#allocation2 + $0x74] sm:$0xf]
    %v64 = vld [vmem:[#allocation2 + $0x78] sm:$0xf]
    %v65 = vld [vmem:[#allocation2 + $0x7c] sm:$0xf]
    %v66 = vld [vmem:[%s2] sm:$0x1]
    %v68 = vperm.slane %v66, 0
    %v102 = vunpack.c.l.b16 %v34
    %v103 = vunpack.c.l.b16 %v35
    %v104 = vunpack.c.l.b16 %v36
    %v105 = vunpack.c.l.b16 %v37
    %v106 = vunpack.c.l.b16 %v38
    %v107 = vunpack.c.l.b16 %v39
    %v108 = vunpack.c.l.b16 %v40
    %v109 = vunpack.c.l.b16 %v41
    %v110 = vunpack.c.l.b16 %v42
    %v111 = vunpack.c.l.b16 %v43
    %v112 = vunpack.c.l.b16 %v44
    %v113 = vunpack.c.l.b16 %v45
    %v114 = vunpack.c.l.b16 %v46
    %v115 = vunpack.c.l.b16 %v47
    %v116 = vunpack.c.l.b16 %v48
    %v117 = vunpack.c.l.b16 %v49
    %v118 = vunpack.c.l.b16 %v50
    %v119 = vunpack.c.l.b16 %v51
    %v120 = vunpack.c.l.b16 %v52
    %v121 = vunpack.c.l.b16 %v53
    %v122 = vunpack.c.l.b16 %v54
    %v123 = vunpack.c.l.b16 %v55
    %v124 = vunpack.c.l.b16 %v56
    %v125 = vunpack.c.l.b16 %v57
    %v126 = vunpack.c.l.b16 %v58
    %v127 = vunpack.c.l.b16 %v59
    %v128 = vunpack.c.l.b16 %v60
    %v129 = vunpack.c.l.b16 %v61
    %v130 = vunpack.c.l.b16 %v62
    %v131 = vunpack.c.l.b16 %v63
    %v132 = vunpack.c.l.b16 %v64
    %v133 = vunpack.c.l.b16 %v65
    %v134 = vpack.c.b16 %v103, %v102
    %v135 = vpack.c.b16 %v105, %v104
    %v136 = vpack.c.b16 %v107, %v106
    %v137 = vpack.c.b16 %v109, %v108
    %v138 = vpack.c.b16 %v111, %v110
    %v139 = vpack.c.b16 %v113, %v112
    %v140 = vpack.c.b16 %v115, %v114
    %v141 = vpack.c.b16 %v117, %v116
    %v142 = vpack.c.b16 %v119, %v118
    %v143 = vpack.c.b16 %v121, %v120
    %v144 = vpack.c.b16 %v123, %v122
    %v145 = vpack.c.b16 %v125, %v124
    %v146 = vpack.c.b16 %v127, %v126
    %v147 = vpack.c.b16 %v129, %v128
    %v148 = vpack.c.b16 %v131, %v130
    %v149 = vpack.c.b16 %v133, %v132
    %166 = vmatpush.bf16.msra.mxu0 %v141
    %167 = vmatpush.bf16.msra.mxu0 %v140
    %168 = vmatpush.bf16.msra.mxu0 %v139
    %169 = vmatpush.bf16.msra.mxu0 %v138
    %170 = vmatpush.bf16.msra.mxu0 %v137
    %171 = vmatpush.bf16.msra.mxu0 %v136
    %172 = vmatpush.bf16.msra.mxu0 %v135
    %173 = vmatpush.bf16.msra.mxu0 %v134
    %174 = vmatmul.bf16.gmra.mxu0 %v32
    %v175 = vpop.f32.mrf.mxu0
    %v176 = vadd.f32 %v68, %v175
    %v177 = vpop.f32.mrf.mxu0
    %178 = vdwg.mxu0
    %179 = vmatpush.bf16.msra.mxu0 %v149
    %180 = vmatpush.bf16.msra.mxu0 %v148
    %181 = vmatpush.bf16.msra.mxu0 %v147
    %182 = vmatpush.bf16.msra.mxu0 %v146
    %183 = vmatpush.bf16.msra.mxu0 %v145
    %184 = vmatpush.bf16.msra.mxu0 %v144
    %185 = vmatpush.bf16.msra.mxu0 %v143
    %186 = vmatpush.bf16.msra.mxu0 %v142
    %187 = vmatmul.bf16.gmra.mxu0 %v33
    %v188 = vpop.f32.mrf.mxu0
    %v189 = vadd.f32 %v176, %v188
    %v190 = vpop.f32.mrf.mxu0
    %191 = vdwg.mxu0
    %192 = vst [vmem:[%s3] sm:$0xff] %v189
    // Predicated region
    $region18: #{fastrcnn_predictor.1} parent=1 // pred_check
      _
    $region19: #{fastrcnn_predictor.1} parent=1 // pred_check_branch
      %194 = sbr.rel (0) target = $region21
    $region20: #{fastrcnn_predictor.1} parent=1 // pred_region
      _
    $region21: #{fastrcnn_predictor.1} parent=1 // pred_fallthru
      _
    // Predicated region
    $region22: #{fastrcnn_predictor.1} parent=1 // pred_check
      _
    $region23: #{fastrcnn_predictor.1} parent=1 // pred_check_branch
      %196 = sbr.rel (0) target = $region25
    $region24: #{fastrcnn_predictor.1} parent=1 // pred_region
      _
    $region25: #{fastrcnn_predictor.1} parent=1 // pred_fallthru
      _
    %197 = vsyncpa [#allocation3], 1

</llo_original>
